<compile_context>
chip_gen: v6e
topology: v6e:2x2x1
jax: 0.10.0
libtpu: 0.0.40
codegen_flags: <defaults>
</compile_context>

<pallas_src>
import functools

import jax
import jax.numpy as jnp
from jax.experimental import pallas as pl
from jax.experimental.pallas import tpu as pltpu


def _cdiv(a: int, b: int) -> int:
    return -(-a // b)


def _round_up(a: int, b: int) -> int:
    return _cdiv(a, b) * b


def _device_kind() -> str:
    try:
        return jax.devices()[0].device_kind.lower()
    except Exception:  # pragma: no cover - defensive
        return ""


def _default_tile_budget() -> int:
    """Per-input, per-buffer tile budget in bytes, tuned per chip generation."""
    kind = _device_kind()
    if "v5 lite" in kind or "v5e" in kind or "v5lite" in kind:
        return 2 * 1024 * 1024   # v5e: ~820 GB/s, bigger tiles buy nothing
    if "v7" in kind:
        return 6 * 1024 * 1024   # v7x: ~3.2 TB/s per TC, amortize step overhead
    return 4 * 1024 * 1024       # v6e default


def _sublane(dtype) -> int:
    """Native sublane packing multiple: 8 for f32, 16 for bf16/f16, 32 for int8."""
    return max(8, 32 // jnp.dtype(dtype).itemsize)


def _mse_pix_kernel(x_ref, y_ref, o_ref, acc_ref, *, inv_hw, k_total, tile_k,
                    needs_mask):
    # x_ref, y_ref : (tile_rows, tile_k) input tiles (any float dtype)
    # o_ref        : (tile_rows, 1) output tile, resident across the k axis
    # acc_ref      : (tile_rows, 128) lane-dense f32 VMEM accumulator
    ki = pl.program_id(1)
    n_chunks = tile_k // 128

    @pl.when(ki == 0)
    def _init():
        acc_ref[...] = jnp.zeros_like(acc_ref)

    # Hoisted once per grid step (not per chunk).
    lane = jax.lax.broadcasted_iota(jnp.int32, (1, 128), 1)
    col_base = ki * tile_k

    def accumulate(off):
        xd = x_ref[:, pl.ds(off, 128)].astype(jnp.float32)
        yd = y_ref[:, pl.ds(off, 128)].astype(jnp.float32)
        d = xd - yd
        sq = d * d
        if needs_mask:
            # Zero out columns beyond the true H*W (tail block reads garbage
            # VMEM for out-of-bounds lanes; the where-select discards it).
            sq = jnp.where(col_base + off + lane < k_total, sq, 0.0)
        acc_ref[...] += sq  # VPU-only add; lane reduce deferred to finalize

    if n_chunks <= 16:
        # Short fixed trip-count: unroll statically for scheduler visibility.
        for j in range(n_chunks):
            accumulate(j * 128)
    else:
        @pl.loop(0, n_chunks)
        def _(j):
            accumulate(pl.multiple_of(j * 128, 128))

    @pl.when(ki == pl.num_programs(1) - 1)
    def _finalize():
        total = jnp.sum(acc_ref[...], axis=1, keepdims=True)  # single XLU reduce
        o_ref[...] = (total * inv_hw).astype(o_ref.dtype)


def mse_pix(x, y, *, target_tile_bytes=None):
    assert x.shape == y.shape and x.ndim == 4, "expected matching NCHW inputs"
    N, C, H, W = x.shape
    R, K = N * C, H * W
    assert R > 0 and K > 0, "empty inputs not supported"
    out_dtype = jnp.result_type(x.dtype, y.dtype)

    # Lane-dense 2-D view: rows = (N*C), columns = flattened H*W (contiguous,
    # so this reshape is free for NCHW inputs). No padding copies are made.
    x2 = x.reshape(R, K)
    y2 = y.reshape(R, K)

    if target_tile_bytes is None:
        target_tile_bytes = _default_tile_budget()

    itemsize = max(jnp.dtype(x.dtype).itemsize, jnp.dtype(y.dtype).itemsize)
    s = max(_sublane(x.dtype), _sublane(y.dtype))

    # ---- K (reduction) tiling: fewest balanced 128-aligned chunks in budget ----
    max_k = max(128, (target_tile_bytes // (s * itemsize)) // 128 * 128)
    n_k = _cdiv(K, max_k)
    tile_k = _round_up(_cdiv(K, n_k), 128)
    n_k = _cdiv(K, tile_k)
    needs_mask = (n_k * tile_k != K)

    # ---- row tiling: balanced, sublane-aligned, acc scratch kept modest ----
    R_s = _round_up(R, s)
    max_rows = max(s, (target_tile_bytes // (tile_k * itemsize)) // s * s)
    max_rows = min(max_rows, 4096)
    n_r = _cdiv(R_s, max_rows)
    tile_rows = _round_up(_cdiv(R_s, n_r), s)
    n_r = _cdiv(R, tile_rows)

    inv_hw = 1.0 / float(K)
    kernel = functools.partial(_mse_pix_kernel, inv_hw=inv_hw, k_total=K,
                               tile_k=tile_k, needs_mask=needs_mask)

    # 2 inputs x 2 double-buffers + f32 accumulator + tiny output buffers.
    vmem_needed = (4 * tile_rows * tile_k * itemsize
                   + tile_rows * 128 * 4
                   + 2 * tile_rows * jnp.dtype(out_dtype).itemsize)
    vmem_limit = int(min(max(vmem_needed + (4 << 20), 32 << 20), 48 << 20))

    cost = pl.CostEstimate(
        flops=3 * R * K + 128 * R,
        transcendentals=0,
        bytes_accessed=2 * R * K * itemsize + R * jnp.dtype(out_dtype).itemsize,
    )

    def run(dim_semantics):
        return pl.pallas_call(
            kernel,
            out_shape=jax.ShapeDtypeStruct((R, 1), out_dtype),
            grid_spec=pltpu.PrefetchScalarGridSpec(
                num_scalar_prefetch=0,
                grid=(n_r, n_k),
                in_specs=[
                    pl.BlockSpec((tile_rows, tile_k), lambda i, k: (i, k)),
                    pl.BlockSpec((tile_rows, tile_k), lambda i, k: (i, k)),
                ],
                out_specs=pl.BlockSpec((tile_rows, 1), lambda i, k: (i, 0)),
                scratch_shapes=[pltpu.VMEM((tile_rows, 128), jnp.float32)],
            ),
            compiler_params=pltpu.CompilerParams(
                dimension_semantics=dim_semantics,
                vmem_limit_bytes=vmem_limit,
            ),
            cost_estimate=cost,
        )(x2, y2)

    # Row axis is embarrassingly parallel; on v7x split it across both
    # TensorCores. Fall back to the portable semantics if unavailable.
    candidates = [("parallel", "arbitrary")]
    if "v7" in _device_kind():
        cp = getattr(pltpu, "CORE_PARALLEL", None)
        arb = getattr(pltpu, "ARBITRARY", None)
        if cp is not None and arb is not None:
            candidates.insert(0, (cp, arb))

    out = None
    last_err = None
    for dim_sems in candidates:
        try:
            out = run(dim_sems)
            break
        except Exception as e:  # pragma: no cover - safe fallback path
            last_err = e
    if out is None:
        raise last_err

    return out[:, 0].reshape(N, C)


if __name__ == "__main__":
    base_key = jax.random.PRNGKey(0)

    # Primary check: aligned shapes (no tails).
    kx, ky = jax.random.split(base_key)
    N, C, H, W = 2, 4, 16, 16
    x = jax.random.normal(kx, (N, C, H, W), dtype=jnp.float32)
    y = jax.random.normal(ky, (N, C, H, W), dtype=jnp.float32)
    out = jax.block_until_ready(mse_pix(x, y))
    ref = jnp.mean((x - y) ** 2, axis=(2, 3))
    assert out.shape == (N, C)
    assert jnp.allclose(out, ref, atol=1e-6, rtol=1e-5)

    # Tail check: rows (N*C=6) not a multiple of 8, K=7*7=49 not a multiple of
    # 128 — exercises the in-kernel column mask and masked row writeback.
    kx2, ky2 = jax.random.split(jax.random.fold_in(base_key, 1))
    x_t = jax.random.normal(kx2, (2, 3, 7, 7), dtype=jnp.float32)
    y_t = jax.random.normal(ky2, (2, 3, 7, 7), dtype=jnp.float32)
    out_t = jax.block_until_ready(mse_pix(x_t, y_t))
    ref_t = jnp.mean((x_t - y_t) ** 2, axis=(2, 3))
    assert out_t.shape == (2, 3)
    assert jnp.allclose(out_t, ref_t, atol=1e-6, rtol=1e-5)

    print("KERNEL_OK")
</pallas_src>

<mosaic_0001>
module attributes {stable_mosaic.version = 11 : i64} {
  func.func @_mse_pix_kernel(%arg0: i32, %arg1: i32, %arg2: memref<8x256xf32, #tpu.memory_space<vmem>>, %arg3: memref<8x256xf32, #tpu.memory_space<vmem>>, %arg4: memref<8x1xf32, #tpu.memory_space<vmem>>, %arg5: memref<8x128xf32, #tpu.memory_space<vmem>>) attributes {dimension_semantics = [#tpu.dimension_semantics<parallel>, #tpu.dimension_semantics<arbitrary>], iteration_bounds = array<i64: 1, 1>, scalar_prefetch = 0 : i64, scratch_operands = 1 : i64, tpu.core_type = #tpu.core_type<tc>, window_params = [{transform_indices = @transform_0, window_bounds = array<i64: 8, 256>}, {transform_indices = @transform_1, window_bounds = array<i64: 8, 256>}, {transform_indices = @transform_2, window_bounds = array<i64: 8, 1>}]} {
    %c0_i32 = arith.constant 0 : i32
    %0 = arith.cmpi eq, %arg1, %c0_i32 : i32
    %1 = arith.extui %0 : i1 to i32
    %c0_i32_0 = arith.constant 0 : i32
    %2 = arith.cmpi ne, %1, %c0_i32_0 : i32
    scf.if %2 {
      %cst = arith.constant 0.000000e+00 : f32
      %20 = vector.broadcast %cst : f32 to vector<8x128xf32>
      %c0_17 = arith.constant 0 : index
      %c0_18 = arith.constant 0 : index
      %21 = vector.load %arg5[%c0_17, %c0_18] : memref<8x128xf32, #tpu.memory_space<vmem>>, vector<8x128xf32>
      tpu.vector_store %arg5[%c0_17, %c0_18], %20 {strides = array<i32>} : memref<8x128xf32, #tpu.memory_space<vmem>>, vector<8x128xf32>,
    } else {
    }
    %c0 = arith.constant 0 : index
    %c0_1 = arith.constant 0 : index
    %3 = vector.load %arg2[%c0, %c0_1] : memref<8x256xf32, #tpu.memory_space<vmem>>, vector<8x128xf32>
    %c0_2 = arith.constant 0 : index
    %c0_3 = arith.constant 0 : index
    %4 = vector.load %arg3[%c0_2, %c0_3] : memref<8x256xf32, #tpu.memory_space<vmem>>, vector<8x128xf32>
    %5 = arith.subf %3, %4 : vector<8x128xf32>
    %6 = arith.mulf %5, %5 : vector<8x128xf32>
    %c0_4 = arith.constant 0 : index
    %c0_5 = arith.constant 0 : index
    %7 = vector.load %arg5[%c0_4, %c0_5] : memref<8x128xf32, #tpu.memory_space<vmem>>, vector<8x128xf32>
    %8 = arith.addf %7, %6 : vector<8x128xf32>
    %c0_6 = arith.constant 0 : index
    %c0_7 = arith.constant 0 : index
    %9 = vector.load %arg5[%c0_6, %c0_7] : memref<8x128xf32, #tpu.memory_space<vmem>>, vector<8x128xf32>
    tpu.vector_store %arg5[%c0_6, %c0_7], %8 {strides = array<i32>} : memref<8x128xf32, #tpu.memory_space<vmem>>, vector<8x128xf32>,
    %c0_8 = arith.constant 0 : index
    %c128 = arith.constant 128 : index
    %10 = vector.load %arg2[%c0_8, %c128] : memref<8x256xf32, #tpu.memory_space<vmem>>, vector<8x128xf32>
    %c0_9 = arith.constant 0 : index
    %c128_10 = arith.constant 128 : index
    %11 = vector.load %arg3[%c0_9, %c128_10] : memref<8x256xf32, #tpu.memory_space<vmem>>, vector<8x128xf32>
    %12 = arith.subf %10, %11 : vector<8x128xf32>
    %13 = arith.mulf %12, %12 : vector<8x128xf32>
    %c0_11 = arith.constant 0 : index
    %c0_12 = arith.constant 0 : index
    %14 = vector.load %arg5[%c0_11, %c0_12] : memref<8x128xf32, #tpu.memory_space<vmem>>, vector<8x128xf32>
    %15 = arith.addf %14, %13 : vector<8x128xf32>
    %c0_13 = arith.constant 0 : index
    %c0_14 = arith.constant 0 : index
    %16 = vector.load %arg5[%c0_13, %c0_14] : memref<8x128xf32, #tpu.memory_space<vmem>>, vector<8x128xf32>
    tpu.vector_store %arg5[%c0_13, %c0_14], %15 {strides = array<i32>} : memref<8x128xf32, #tpu.memory_space<vmem>>, vector<8x128xf32>,
    %c0_i32_15 = arith.constant 0 : i32
    %17 = arith.cmpi eq, %arg1, %c0_i32_15 : i32
    %18 = arith.extui %17 : i1 to i32
    %c0_i32_16 = arith.constant 0 : i32
    %19 = arith.cmpi ne, %18, %c0_i32_16 : i32
    scf.if %19 {
      %c0_17 = arith.constant 0 : index
      %c0_18 = arith.constant 0 : index
      %20 = vector.load %arg5[%c0_17, %c0_18] : memref<8x128xf32, #tpu.memory_space<vmem>>, vector<8x128xf32>
      %cst = arith.constant dense<0.000000e+00> : vector<8xf32>
      %21 = vector.multi_reduction <add>, %20, %cst [1] : vector<8x128xf32> to vector<8xf32>
      %22 = vector.shape_cast %21 : vector<8xf32> to vector<8x1xf32>
      %cst_19 = arith.constant 3.906250e-03 : f32
      %23 = vector.broadcast %cst_19 : f32 to vector<8x1xf32>
      %24 = arith.mulf %22, %23 : vector<8x1xf32>
      %c0_20 = arith.constant 0 : index
      %c0_21 = arith.constant 0 : index
      %25 = vector.load %arg4[%c0_20, %c0_21] : memref<8x1xf32, #tpu.memory_space<vmem>>, vector<8x1xf32>
      tpu.vector_store %arg4[%c0_20, %c0_21], %24 {strides = array<i32>} : memref<8x1xf32, #tpu.memory_space<vmem>>, vector<8x1xf32>,
    } else {
    }
    return
  }
  func.func @transform_0(%arg0: i32, %arg1: i32) -> (i32, i32) {
    %c0_i32 = arith.constant 0 : i32
    return %arg0, %arg1 : i32, i32
  }
  func.func @transform_1(%arg0: i32, %arg1: i32) -> (i32, i32) {
    %c0_i32 = arith.constant 0 : i32
    return %arg0, %arg1 : i32, i32
  }
  func.func @transform_2(%arg0: i32, %arg1: i32) -> (i32, i32) {
    %c0_i32 = arith.constant 0 : i32
    %c0_i32_0 = arith.constant 0 : i32
    return %arg0, %c0_i32 : i32, i32
  }
}

</mosaic_0001>

<llo_original>
// kernel: tpu_custom_call.1
$region0: #{tpu_custom_call.1}
  #allocation0 [shape = 'u32[]', space=smem, size = 0x4, offset = 0x4, fixed_abs, tag = 'smem constant byte address 0x4 - core index']
  #allocation1 [shape = 'u32[144,128]{1,0:T(1,128)}', space=vmem, size = 0x12000, scoped, tag = 'internal scratch']
  #allocation2 [shape = 'f32[8,128]{1,0:T(8,128)}', space=vmem, size = 0x1000, scoped, tag = 'scratch operand']
  %s0 = inlined_call_operand.hbm [shape: f32[8,256], index: 0, kind: input, shape index: {}]
  %s1 = inlined_call_operand.hbm [shape: f32[8,256], index: 1, kind: input, shape index: {}]
  %s2 = inlined_call_operand.vmem [shape: f32[8,1], index: 2, kind: output, shape index: {}]
  %s3 = sld [smem:[#allocation0]]
  $region34: #{tpu_custom_call.1} parent=0
    _
  %s5 = ssub.s32 1, %s3
  %s6 = scalar_select 0, %s5, %s3
  $region1: #{tpu_custom_call.1} parent=0
    #allocation3 [shape = 'u8[8192]{0}', space=vmem, size = 0x2000, scoped, tag = 'input window, operand 0, single buffered']
    #allocation4 [shape = 's32[1]{0}', space=sflag, size = 0x4, scoped, tag = 'scoped memory for tpu_custom_call.1']
    #allocation5 [shape = 'u8[8192]{0}', space=vmem, size = 0x2000, scoped, tag = 'input window, operand 1, single buffered']
    #allocation6 [shape = 's32[1]{0}', space=sflag, size = 0x4, scoped, tag = 'scoped memory for tpu_custom_call.1']
    %7 = vsyncpa [#allocation4], 0
    %8 = vsyncpa [#allocation6], 0
    // Predicated region
    $region2: #{tpu_custom_call.1} parent=1 // pred_check
      _
    $region3: #{tpu_custom_call.1} parent=1 // pred_check_branch
      %10 = sbr.rel (0) target = $region5
    $region4: #{tpu_custom_call.1} parent=1 // pred_region
      %s12 = ssub.s32 256, 256
      %13 = vsyncadd [#allocation4], %s12
      %s15 = sshll.u32 [#allocation3], 4
      %s16 = int_to_ptr.vmem [resolvable:$true] %s15
      %18 = dma.hbm_to_vmem [thread:$0]  %s0, 256, %s16, [#allocation4]
    $region5: #{tpu_custom_call.1} parent=1 // pred_fallthru
      _
    // Predicated region
    $region6: #{tpu_custom_call.1} parent=1 // pred_check
      _
    $region7: #{tpu_custom_call.1} parent=1 // pred_check_branch
      %20 = sbr.rel (0) target = $region9
    $region8: #{tpu_custom_call.1} parent=1 // pred_region
      %s22 = ssub.s32 256, 256
      %23 = vsyncadd [#allocation6], %s22
      %s25 = sshll.u32 [#allocation5], 4
      %s26 = int_to_ptr.vmem [resolvable:$true] %s25
      %28 = dma.hbm_to_vmem [thread:$0]  %s1, 256, %s26, [#allocation6]
    $region9: #{tpu_custom_call.1} parent=1 // pred_fallthru
      _
    // Predicated region
    $region10: #{tpu_custom_call.1} parent=1 // pred_check
      _
    $region11: #{tpu_custom_call.1} parent=1 // pred_check_branch
      %30 = sbr.rel (0) target = $region13
    $region12: #{tpu_custom_call.1} parent=1 // pred_region
      %31 = dma.done [#allocation4], 256
    $region13: #{tpu_custom_call.1} parent=1 // pred_fallthru
      _
    // Predicated region
    $region14: #{tpu_custom_call.1} parent=1 // pred_check
      _
    $region15: #{tpu_custom_call.1} parent=1 // pred_check_branch
      %33 = sbr.rel (0) target = $region17
    $region16: #{tpu_custom_call.1} parent=1 // pred_region
      %34 = dma.done [#allocation6], 256
    $region17: #{tpu_custom_call.1} parent=1 // pred_fallthru
      _
    %p35 = scmp.eq.s32.totalorder 0, 0
    // Predicated region
    $region18: #{tpu_custom_call.1} parent=1 // pred_check
      %p36 = pneg %p35
    $region19: #{tpu_custom_call.1} parent=1 // pred_check_branch
      %38 = sbr.rel (%p36) target = $region21
    $region20: #{tpu_custom_call.1} parent=1 // pred_region
      %39 = vst [vmem:[#allocation2] sm:$0xff] 0.0
    $region21: #{tpu_custom_call.1} parent=1 // pred_fallthru
      _
    %v40 = vld [vmem:[#allocation3] sm:$0xff]
    %v41 = vld [vmem:[#allocation5] sm:$0xff]
    %v42 = vsub.f32 %v40, %v41
    %v43 = vmul.f32 %v42, %v42
    %v44 = vld [vmem:[#allocation2] sm:$0xff]
    %v45 = vadd.f32 %v44, %v43
    %46 = vst [vmem:[#allocation2] sm:$0xff] %v45
    %v47 = vld [vmem:[#allocation3 + $0x8] sm:$0xff]
    %v48 = vld [vmem:[#allocation5 + $0x8] sm:$0xff]
    %v49 = vsub.f32 %v47, %v48
    %v50 = vmul.f32 %v49, %v49
    %v51 = vld [vmem:[#allocation2] sm:$0xff]
    %v52 = vadd.f32 %v51, %v50
    %53 = vst [vmem:[#allocation2] sm:$0xff] %v52
    // Predicated region
    $region22: #{tpu_custom_call.1} parent=1 // pred_check
      %p54 = pneg %p35
    $region23: #{tpu_custom_call.1} parent=1 // pred_check_branch
      %56 = sbr.rel (%p54) target = $region25
    $region24: #{tpu_custom_call.1} parent=1 // pred_region
      %v57 = vld [vmem:[#allocation2] sm:$0xff]
      %58 = vadd.xlane.f32.xlu0 %v57
      %v59 = vpop.xlane.xlu0 %58
      %v60 = vmul.f32 %v59, 0.00390625
      %vm61 = vcmask 7168
      %62 = vst.msk [vmem:[%s2] sm:$0xff] %vm61, %v60
    $region25: #{tpu_custom_call.1} parent=1 // pred_fallthru
      _
    // Predicated region
    $region26: #{tpu_custom_call.1} parent=1 // pred_check
      _
    $region27: #{tpu_custom_call.1} parent=1 // pred_check_branch
      %64 = sbr.rel (0) target = $region29
    $region28: #{tpu_custom_call.1} parent=1 // pred_region
      _
    $region29: #{tpu_custom_call.1} parent=1 // pred_fallthru
      _
    // Predicated region
    $region30: #{tpu_custom_call.1} parent=1 // pred_check
      _
    $region31: #{tpu_custom_call.1} parent=1 // pred_check_branch
      %66 = sbr.rel (0) target = $region33
    $region32: #{tpu_custom_call.1} parent=1 // pred_region
      _
    $region33: #{tpu_custom_call.1} parent=1 // pred_fallthru
      _
    %67 = vsyncpa [#allocation4], 1
    %68 = vsyncpa [#allocation6], 1

</llo_original>
